<compile_context>
chip_gen: v7x
topology: tpu7x:2x2x1
jax: 0.10.0
libtpu: 0.0.40
codegen_flags: <defaults>
</compile_context>

<pallas_src>
import functools
import math

import jax
import jax.numpy as jnp
from jax import lax
from jax.experimental import pallas as pl
from jax.experimental.pallas import tpu as pltpu

EPS = 1e-5

# ~4 MiB (f32) row tiles: large enough to amortize the ~0.35 us/grid-step
# overhead (>=85% of HBM roofline in measured tiled sweeps), small enough that
# the double-buffered working set of either pass stays inside the explicit
# scoped-VMEM budget below on v5e/v6e (128 MiB physical) and v7x (64 MiB).
_TARGET_TILE_BYTES = 4 * 1024 * 1024
_VMEM_LIMIT_BYTES = 40 * 1024 * 1024
# Fast path threshold on the f32 tensor size (whole tensor resident in VMEM).
_FUSED_MAX_BYTES = 3 * 1024 * 1024


def _bn_fused_kernel(gamma_ref, beta_ref, x_ref, o_ref, *, eps):
    """Single-shot BN: x fully resident in VMEM; centered (robust) variance."""
    x = x_ref[...].astype(jnp.float32)
    mean = jnp.mean(x, axis=0, keepdims=True)
    var = jnp.mean((x - mean) ** 2, axis=0, keepdims=True)
    inv_std = lax.rsqrt(var + eps)
    scale = gamma_ref[...].astype(jnp.float32) * inv_std
    shift = beta_ref[...].astype(jnp.float32) - mean * scale
    o_ref[...] = (x * scale + shift).astype(o_ref.dtype)


def _bn_stats_kernel(x_ref, sum_ref, sumsq_ref, *, tm, mf, rows_per_split,
                     acc_rows, needs_mask):
    """Pass 1: per-lane sum / sum-of-squares, accumulated per core-split."""
    c = pl.program_id(0)          # core-split axis ("parallel")
    i = pl.program_id(1)          # row-tile axis ("arbitrary", accumulating)

    @pl.when(i == 0)
    def _():
        sum_ref[...] = jnp.zeros_like(sum_ref)
        sumsq_ref[...] = jnp.zeros_like(sumsq_ref)

    x = x_ref[...].astype(jnp.float32)
    if needs_mask:
        # Zero rows past the true (folded) row count: covers the ragged last
        # tile and any clamped overhang tile of the core split.
        row = lax.broadcasted_iota(jnp.int32, (tm, 1), 0)
        base = (c * rows_per_split + i) * tm
        x = jnp.where(base + row < mf, x, 0.0)

    # Per-sublane VALU accumulation into an [acc_rows, CL] resident output;
    # the adds hide under the tile DMA on all generations.
    xr = x.reshape(tm // acc_rows, acc_rows, x.shape[1])
    sum_ref[...] += xr.sum(axis=0)
    sumsq_ref[...] += (xr * xr).sum(axis=0)


def _bn_norm_kernel(scale_ref, shift_ref, x_ref, o_ref):
    """Pass 2: y = x * scale + shift (scale/shift stay VMEM-resident)."""
    x = x_ref[...].astype(jnp.float32)
    o_ref[...] = (x * scale_ref[...] + shift_ref[...]).astype(o_ref.dtype)


def batchnorm1d(x, gamma, beta, eps=EPS):
    """x: [N, T, C]; gamma, beta: [C]. Training-mode BatchNorm1d forward."""
    N, T, C = x.shape
    M = N * T
    x2d = x.reshape(M, C)

    # ---- Fast path: whole tensor fits comfortably in VMEM (1 read + 1 write).
    if M * C * 4 <= _FUSED_MAX_BYTES:
        out2d = pl.pallas_call(
            functools.partial(_bn_fused_kernel, eps=eps),
            out_shape=jax.ShapeDtypeStruct((M, C), x.dtype),
            grid=(1,),
            in_specs=[
                pl.BlockSpec((1, C), lambda i: (0, 0)),
                pl.BlockSpec((1, C), lambda i: (0, 0)),
                pl.BlockSpec((M, C), lambda i: (0, 0)),
            ],
            out_specs=pl.BlockSpec((M, C), lambda i: (0, 0)),
            compiler_params=pltpu.CompilerParams(
                dimension_semantics=("arbitrary",),
                vmem_limit_bytes=_VMEM_LIMIT_BYTES),
        )(gamma.reshape(1, C), beta.reshape(1, C), x2d)
        return out2d.reshape(N, T, C)

    # ---- Lane-dense fold: view [M, C] as [M/k, k*C] with k*C % 128 == 0. ----
    k = 128 // math.gcd(C, 128)
    if M % k != 0:
        k = 1          # can't fold for free; stay at [M, C] (lane-sparse but
                       # avoids any jnp.pad / [:M] round-trip through HBM)
    CL = k * C
    mf = M // k
    xf = x2d.reshape(mf, CL)       # pure view, no copy

    # Row-tile size: as large as the VMEM budget allows (cap removed); keep it
    # (8,128)-aligned except for the tiny single-tile corner.
    desired = max(8, (_TARGET_TILE_BYTES // (CL * 4)) // 8 * 8)
    if mf < 8:
        tm = mf                        # full second-minor dim (exempt)
    else:
        tm = min(desired, (mf // 8) * 8)
    grid_rows = pl.cdiv(mf, tm)
    acc_rows = 8 if tm % 8 == 0 else tm

    # Split the stats pass across TensorCores (2 on v7x; harmless elsewhere).
    num_split = 2 if grid_rows >= 2 else 1
    rows_per_split = pl.cdiv(grid_rows, num_split)
    exact_split = num_split * rows_per_split == grid_rows
    needs_mask = (mf % tm != 0) or (not exact_split)

    if exact_split:
        x_map = lambda c, i: (c * rows_per_split + i, 0)
    else:
        # Clamp overhang steps onto the last valid tile; their contribution is
        # masked to zero in-kernel, so no out-of-range block is requested.
        x_map = lambda c, i: (jnp.minimum(c * rows_per_split + i,
                                          grid_rows - 1), 0)

    # ---- Pass 1: per-lane sum / sum-of-squares over row tiles. --------------
    stats_kernel = functools.partial(
        _bn_stats_kernel, tm=tm, mf=mf, rows_per_split=rows_per_split,
        acc_rows=acc_rows, needs_mask=needs_mask)
    sum_rows, sumsq_rows = pl.pallas_call(
        stats_kernel,
        out_shape=(
            jax.ShapeDtypeStruct((num_split * acc_rows, CL), jnp.float32),
            jax.ShapeDtypeStruct((num_split * acc_rows, CL), jnp.float32),
        ),
        grid=(num_split, rows_per_split),
        in_specs=[pl.BlockSpec((tm, CL), x_map)],
        out_specs=(
            pl.BlockSpec((acc_rows, CL), lambda c, i: (c, 0)),
            pl.BlockSpec((acc_rows, CL), lambda c, i: (c, 0)),
        ),
        compiler_params=pltpu.CompilerParams(
            dimension_semantics=("parallel", "arbitrary"),
            vmem_limit_bytes=_VMEM_LIMIT_BYTES),
    )(xf)

    # ---- Tiny glue: fold cores / sublanes / k segments -> per-channel. ------
    sum_c = sum_rows.reshape(-1, k, C).sum(axis=(0, 1))
    sumsq_c = sumsq_rows.reshape(-1, k, C).sum(axis=(0, 1))
    mean = sum_c / M
    # NOTE: E[x^2] - E[x]^2 in f32, clamped against cancellation; data with
    # |mean| >> std would want a centered second pass for full precision.
    var = jnp.maximum(sumsq_c / M - mean * mean, 0.0)
    inv_std = lax.rsqrt(var + eps)
    scale_c = gamma.astype(jnp.float32) * inv_std
    shift_c = beta.astype(jnp.float32) - mean * scale_c
    scale = jnp.tile(scale_c, k).reshape(1, CL)
    shift = jnp.tile(shift_c, k).reshape(1, CL)
    # TODO(synk): nn.BatchNorm1d training also updates running_mean /
    # running_var (unbiased variance); only the normalization forward is done.

    # ---- Pass 2: y = x * scale + shift over row tiles ("parallel"). ---------
    out_f = pl.pallas_call(
        _bn_norm_kernel,
        out_shape=jax.ShapeDtypeStruct((mf, CL), x.dtype),
        grid=(grid_rows,),
        in_specs=[
            pl.BlockSpec((1, CL), lambda i: (0, 0)),
            pl.BlockSpec((1, CL), lambda i: (0, 0)),
            pl.BlockSpec((tm, CL), lambda i: (i, 0)),
        ],
        out_specs=pl.BlockSpec((tm, CL), lambda i: (i, 0)),
        compiler_params=pltpu.CompilerParams(
            dimension_semantics=("parallel",),
            vmem_limit_bytes=_VMEM_LIMIT_BYTES),
    )(scale, shift, xf)

    return out_f.reshape(N, T, C)


if __name__ == "__main__":
    key = jax.random.PRNGKey(0)

    def reference(x, gamma, beta, eps=EPS):
        n, t, c = x.shape
        xr = x.reshape(n * t, c).astype(jnp.float32)
        mean = xr.mean(axis=0, keepdims=True)
        var = ((xr - mean) ** 2).mean(axis=0, keepdims=True)
        y = (xr - mean) / jnp.sqrt(var + eps) * gamma + beta
        return y.reshape(n, t, c).astype(x.dtype)

    cases = [
        (2, 8, 32),        # tiny: fused single-kernel in-VMEM path
        (3, 4000, 128),    # tiled path, k=1, ragged last tile, 2-way core split
        (2, 9000, 64),     # tiled path, lane fold k=2, ragged last tile
    ]
    for idx, (N, T, C) in enumerate(cases):
        kx, kg, kb, key = jax.random.split(key, 4)
        x = jax.random.normal(kx, (N, T, C), dtype=jnp.float32)
        # nn.BatchNorm1d init is weight=1, bias=0; perturb to exercise affine.
        gamma = 1.0 + 0.1 * jax.random.normal(kg, (C,), dtype=jnp.float32)
        beta = 0.1 * jax.random.normal(kb, (C,), dtype=jnp.float32)

        out = batchnorm1d(x, gamma, beta)
        jax.block_until_ready(out)

        ref = reference(x, gamma, beta)
        assert out.shape == ref.shape, f"shape mismatch in case {idx}"
        assert jnp.allclose(out, ref, atol=1e-4, rtol=1e-4), \
            f"value mismatch in case {idx}"

    print("KERNEL_OK")
</pallas_src>

<mosaic_0001>
module attributes {stable_mosaic.version = 11 : i64} {
  func.func @_bn_fused_kernel(%arg0: i32, %arg1: memref<1x32xf32, #tpu.memory_space<vmem>>, %arg2: memref<1x32xf32, #tpu.memory_space<vmem>>, %arg3: memref<16x32xf32, #tpu.memory_space<vmem>>, %arg4: memref<16x32xf32, #tpu.memory_space<vmem>>) attributes {dimension_semantics = [#tpu.dimension_semantics<arbitrary>], iteration_bounds = array<i64: 1>, scalar_prefetch = 0 : i64, scratch_operands = 0 : i64, tpu.core_type = #tpu.core_type<tc>, window_params = [{pipeline_mode = #tpu.pipeline_mode<synchronous>, transform_indices = @transform_0, window_bounds = array<i64: 1, 32>}, {pipeline_mode = #tpu.pipeline_mode<synchronous>, transform_indices = @transform_1, window_bounds = array<i64: 1, 32>}, {pipeline_mode = #tpu.pipeline_mode<synchronous>, transform_indices = @transform_2, window_bounds = array<i64: 16, 32>}, {pipeline_mode = #tpu.pipeline_mode<synchronous>, transform_indices = @transform_3, window_bounds = array<i64: 16, 32>}]} {
    %c0 = arith.constant 0 : index
    %c0_0 = arith.constant 0 : index
    %0 = vector.load %arg3[%c0, %c0_0] : memref<16x32xf32, #tpu.memory_space<vmem>>, vector<16x32xf32>
    %cst = arith.constant dense<0.000000e+00> : vector<32xf32>
    %1 = vector.multi_reduction <add>, %0, %cst [0] : vector<16x32xf32> to vector<32xf32>
    %2 = vector.shape_cast %1 : vector<32xf32> to vector<1x32xf32>
    %cst_1 = arith.constant 1.600000e+01 : f32
    %3 = vector.broadcast %cst_1 : f32 to vector<1x32xf32>
    %4 = arith.divf %2, %3 : vector<1x32xf32>
    %5 = vector.broadcast %4 : vector<1x32xf32> to vector<16x32xf32>
    %6 = arith.subf %0, %5 : vector<16x32xf32>
    %7 = arith.mulf %6, %6 : vector<16x32xf32>
    %cst_2 = arith.constant dense<0.000000e+00> : vector<32xf32>
    %8 = vector.multi_reduction <add>, %7, %cst_2 [0] : vector<16x32xf32> to vector<32xf32>
    %9 = vector.shape_cast %8 : vector<32xf32> to vector<1x32xf32>
    %cst_3 = arith.constant 1.600000e+01 : f32
    %10 = vector.broadcast %cst_3 : f32 to vector<1x32xf32>
    %11 = arith.divf %9, %10 : vector<1x32xf32>
    %cst_4 = arith.constant 9.99999974E-6 : f32
    %12 = vector.broadcast %cst_4 : f32 to vector<1x32xf32>
    %13 = arith.addf %11, %12 : vector<1x32xf32>
    %14 = math.rsqrt %13 : vector<1x32xf32>
    %c0_5 = arith.constant 0 : index
    %c0_6 = arith.constant 0 : index
    %15 = vector.load %arg1[%c0_5, %c0_6] : memref<1x32xf32, #tpu.memory_space<vmem>>, vector<1x32xf32>
    %16 = arith.mulf %15, %14 : vector<1x32xf32>
    %c0_7 = arith.constant 0 : index
    %c0_8 = arith.constant 0 : index
    %17 = vector.load %arg2[%c0_7, %c0_8] : memref<1x32xf32, #tpu.memory_space<vmem>>, vector<1x32xf32>
    %18 = arith.mulf %4, %16 : vector<1x32xf32>
    %19 = arith.subf %17, %18 : vector<1x32xf32>
    %20 = vector.broadcast %16 : vector<1x32xf32> to vector<16x32xf32>
    %21 = arith.mulf %0, %20 : vector<16x32xf32>
    %22 = vector.broadcast %19 : vector<1x32xf32> to vector<16x32xf32>
    %23 = arith.addf %21, %22 : vector<16x32xf32>
    %c0_9 = arith.constant 0 : index
    %c0_10 = arith.constant 0 : index
    %24 = vector.load %arg4[%c0_9, %c0_10] : memref<16x32xf32, #tpu.memory_space<vmem>>, vector<16x32xf32>
    tpu.vector_store %arg4[%c0_9, %c0_10], %23 {strides = array<i32>} : memref<16x32xf32, #tpu.memory_space<vmem>>, vector<16x32xf32>,
    return
  }
  func.func @transform_0(%arg0: i32) -> (i32, i32) {
    %c0_i32 = arith.constant 0 : i32
    %c0_i32_0 = arith.constant 0 : i32
    %c0_i32_1 = arith.constant 0 : i32
    return %c0_i32, %c0_i32_0 : i32, i32
  }
  func.func @transform_1(%arg0: i32) -> (i32, i32) {
    %c0_i32 = arith.constant 0 : i32
    %c0_i32_0 = arith.constant 0 : i32
    %c0_i32_1 = arith.constant 0 : i32
    return %c0_i32, %c0_i32_0 : i32, i32
  }
  func.func @transform_2(%arg0: i32) -> (i32, i32) {
    %c0_i32 = arith.constant 0 : i32
    %c0_i32_0 = arith.constant 0 : i32
    %c0_i32_1 = arith.constant 0 : i32
    return %c0_i32, %c0_i32_0 : i32, i32
  }
  func.func @transform_3(%arg0: i32) -> (i32, i32) {
    %c0_i32 = arith.constant 0 : i32
    %c0_i32_0 = arith.constant 0 : i32
    %c0_i32_1 = arith.constant 0 : i32
    return %c0_i32, %c0_i32_0 : i32, i32
  }
}

</mosaic_0001>

<llo_original>
// kernel: tpu_custom_call.1
$region0: #{tpu_custom_call.1}
  #allocation0 [shape = 'u32[]', space=smem, size = 0x4, offset = 0x4, fixed_abs, tag = 'smem constant byte address 0x4 - core index']
  #allocation1 [shape = 'u32[144,128]{1,0:T(1,128)}', space=vmem, size = 0x12000, scoped, tag = 'internal scratch']
  %s0 = inlined_call_operand.hbm [shape: f32[1,32], index: 0, kind: input, shape index: {}]
  %s1 = inlined_call_operand.vmem [shape: f32[1,32], index: 1, kind: input, shape index: {}]
  %s2 = inlined_call_operand.hbm [shape: f32[16,32], index: 2, kind: input, shape index: {}]
  %s3 = inlined_call_operand.hbm [shape: f32[16,32], index: 3, kind: output, shape index: {}]
  %s4 = sld [smem:[#allocation0]]
  $region30: #{tpu_custom_call.1} parent=0
    _
  %s6 = ssub.s32 1, %s4
  %s7 = scalar_select 0, %s6, %s4
  $region1: #{tpu_custom_call.1} parent=0
    #allocation2 [shape = 'u8[512]{0}', space=vmem, size = 0x400, scoped, tag = 'input window, operand 0, single buffered']
    #allocation3 [shape = 's32[1]{0}', space=sflag, size = 0x4, scoped, tag = 'scoped memory for tpu_custom_call.1']
    #allocation4 [shape = 's32[1]{0}', space=sflag, size = 0x4, scoped, tag = 'scoped memory for tpu_custom_call.1']
    #allocation5 [shape = 'u8[8192]{0}', space=vmem, size = 0x2000, scoped, tag = 'input window, operand 2, single buffered']
    #allocation6 [shape = 's32[1]{0}', space=sflag, size = 0x4, scoped, tag = 'scoped memory for tpu_custom_call.1']
    #allocation7 [shape = 'u8[8192]{0}', space=vmem, size = 0x2000, scoped, tag = 'output window, operand 0, single buffered']
    %8 = vsyncpa [#allocation3], 0
    %9 = vsyncpa [#allocation6], 0
    %10 = vsyncpa [#allocation4], 0
    // Predicated region
    $region2: #{tpu_custom_call.1} parent=1 // pred_check
      _
    $region3: #{tpu_custom_call.1} parent=1 // pred_check_branch
      %12 = sbr.rel (0) target = $region5
    $region4: #{tpu_custom_call.1} parent=1 // pred_region
      %s14 = ssub.s32 16, 16
      %15 = vsyncadd [#allocation3], %s14
      %s17 = sshll.u32 [#allocation2], 4
      %s18 = int_to_ptr.vmem [resolvable:$true] %s17
      %20 = dma.hbm_to_vmem [thread:$0]  %s0, 16, %s18, [#allocation3]
    $region5: #{tpu_custom_call.1} parent=1 // pred_fallthru
      _
    // Predicated region
    $region6: #{tpu_custom_call.1} parent=1 // pred_check
      _
    $region7: #{tpu_custom_call.1} parent=1 // pred_check_branch
      %22 = sbr.rel (0) target = $region9
    $region8: #{tpu_custom_call.1} parent=1 // pred_region
      _
    $region9: #{tpu_custom_call.1} parent=1 // pred_fallthru
      _
    // Predicated region
    $region10: #{tpu_custom_call.1} parent=1 // pred_check
      _
    $region11: #{tpu_custom_call.1} parent=1 // pred_check_branch
      %24 = sbr.rel (0) target = $region13
    $region12: #{tpu_custom_call.1} parent=1 // pred_region
      %s26 = ssub.s32 256, 256
      %27 = vsyncadd [#allocation6], %s26
      %s28 = sshll.u32 [#allocation5], 4
      %s29 = int_to_ptr.vmem [resolvable:$true] %s28
      %34 = dma.hbm_to_vmem [thread:$0]  %s2, 256, %s29, [#allocation6], 128, 128, 8
    $region13: #{tpu_custom_call.1} parent=1 // pred_fallthru
      _
    // Predicated region
    $region14: #{tpu_custom_call.1} parent=1 // pred_check
      _
    $region15: #{tpu_custom_call.1} parent=1 // pred_check_branch
      %36 = sbr.rel (0) target = $region17
    $region16: #{tpu_custom_call.1} parent=1 // pred_region
      %37 = dma.done [#allocation3], 16
    $region17: #{tpu_custom_call.1} parent=1 // pred_fallthru
      _
    // Predicated region
    $region18: #{tpu_custom_call.1} parent=1 // pred_check
      _
    $region19: #{tpu_custom_call.1} parent=1 // pred_check_branch
      %39 = sbr.rel (0) target = $region21
    $region20: #{tpu_custom_call.1} parent=1 // pred_region
      %40 = dma.done [#allocation6], 256
    $region21: #{tpu_custom_call.1} parent=1 // pred_fallthru
      _
    %v41 = vld [vmem:[#allocation5] sm:$0xff]
    %v42 = vld [vmem:[#allocation5 + $0x8] sm:$0xff]
    %vm43 = vcmask 261120
    %v44 = vsel %vm43, %v41, 0.0
    %v45 = vsel %vm43, %v42, 0.0
    %v46 = vadd.f32 %v44, %v45
    %v47 = vrot.slane %v46, 4
    %v48 = vadd.f32 %v46, %v47
    %v49 = vrot.slane %v48, 2
    %v50 = vadd.f32 %v48, %v49
    %v51 = vrot.slane %v50, 1
    %v52 = vadd.f32 %v50, %v51
    %v53 = vrcp.pop 16.0
    %v54 = vmul.f32 %v52, %v53
    %v55 = vsub.f32 %v41, %v54
    %v56 = vsub.f32 %v42, %v54
    %v57 = vmul.f32 %v55, %v55
    %v58 = vmul.f32 %v56, %v56
    %v59 = vsel %vm43, %v57, 0.0
    %v60 = vsel %vm43, %v58, 0.0
    %v61 = vadd.f32 %v59, %v60
    %v62 = vrot.slane %v61, 4
    %v63 = vadd.f32 %v61, %v62
    %v64 = vrot.slane %v63, 2
    %v65 = vadd.f32 %v63, %v64
    %v66 = vrot.slane %v65, 1
    %v67 = vadd.f32 %v65, %v66
    %v68 = vmul.f32 %v67, %v53
    %v69 = vadd.f32 %v68, 1e-05
    %v70 = vrsqrt.pop %v69
    %v71 = vld [vmem:[#allocation2] sm:$0x1]
    %v72 = vmul.f32 %v71, %v70
    %v73 = vld [vmem:[%s1] sm:$0x1]
    %v74 = vmul.f32 %v54, %v72
    %v75 = vsub.f32 %v73, %v74
    %v77 = vlaneseq
    %v78 = vshrl.u32 %v77, 7
    %v79 = vsub.s32 0, %v78
    %v80 = vrot.slane %v72, %v79
    %v82 = vmul.f32 %v41, %v80
    %v83 = vmul.f32 %v42, %v80
    %v85 = vlaneseq
    %v86 = vshrl.u32 %v85, 7
    %v87 = vsub.s32 0, %v86
    %v88 = vrot.slane %v75, %v87
    %v90 = vadd.f32 %v82, %v88
    %v91 = vadd.f32 %v83, %v88
    %92 = vst.msk [vmem:[#allocation7] sm:$0xff] %vm43, %v90
    %93 = vst.msk [vmem:[#allocation7 + $0x8] sm:$0xff] %vm43, %v91
    // Predicated region
    $region22: #{tpu_custom_call.1} parent=1 // pred_check
      _
    $region23: #{tpu_custom_call.1} parent=1 // pred_check_branch
      %95 = sbr.rel (0) target = $region25
    $region24: #{tpu_custom_call.1} parent=1 // pred_region
      %s97 = ssub.s32 256, 256
      %98 = vsyncadd [#allocation4], %s97
      %s99 = sshll.u32 [#allocation7], 4
      %s100 = int_to_ptr.vmem [resolvable:$true] %s99
      %105 = dma.vmem_to_hbm [thread:$0]  %s100, 256, %s3, [#allocation4], 128, 128, 8
    $region25: #{tpu_custom_call.1} parent=1 // pred_fallthru
      _
    // Predicated region
    $region26: #{tpu_custom_call.1} parent=1 // pred_check
      _
    $region27: #{tpu_custom_call.1} parent=1 // pred_check_branch
      %107 = sbr.rel (0) target = $region29
    $region28: #{tpu_custom_call.1} parent=1 // pred_region
      %108 = dma.done [#allocation4], 256
    $region29: #{tpu_custom_call.1} parent=1 // pred_fallthru
      _
    %109 = vsyncpa [#allocation3], 1
    %110 = vsyncpa [#allocation6], 1
    %111 = vsyncpa [#allocation4], 1

</llo_original>
